<compile_context>
chip_gen: v5e
topology: v5e:2x2
jax: 0.10.0
libtpu: 0.0.40
codegen_flags: <defaults>
</compile_context>

<pallas_src>
import jax
import jax.numpy as jnp
from jax.experimental import pallas as pl
from jax.experimental.pallas import tpu as pltpu


def param_enc_kernel(xy_ref, aug_ref,
                     w1xy_ref, w1a_ref, b1_ref,
                     w2_ref, b2_ref, w3_ref, b3_ref,
                     o_ref):
    # Per-block views: xy_ref (TB, n_spt, d_xy), aug_ref (TB, d_aug),
    # o_ref (TB, n_out).  Weights/biases are full arrays resident in VMEM.
    xy = xy_ref[...]                                   # (TB, n_spt, d_xy) f32
    aug = aug_ref[...]                                 # (TB, d_aug)       f32

    # Per-task layer-1 bias from the aug term (exact rewrite of
    # aug.repeat(n_spt, 1) -> concat -> Linear).
    aug_b1 = (jnp.dot(aug, w1a_ref[...], preferred_element_type=jnp.float32)
              + b1_ref[...])                           # (TB, H1)

    # Layer 1: one batched matmul over all tasks/support points + ReLU.
    h1 = jnp.einsum('tsi,ih->tsh', xy, w1xy_ref[...],
                    preferred_element_type=jnp.float32)
    h1 = jnp.maximum(h1 + aug_b1[:, None, :], 0.0)     # (TB, n_spt, H1)

    # Layer 2 + ReLU.
    h2 = jnp.einsum('tsh,hk->tsk', h1, w2_ref[...],
                    preferred_element_type=jnp.float32) + b2_ref[...]
    h2 = jnp.maximum(h2, 0.0)                          # (TB, n_spt, H2)

    # Mean over the support set BEFORE the last linear (mathematically exact),
    # then one small (TB, H2) @ (H2, n_out) matmul.
    h2_mean = jnp.mean(h2, axis=1)                     # (TB, H2)
    out = (jnp.dot(h2_mean, w3_ref[...], preferred_element_type=jnp.float32)
           + b3_ref[...])
    o_ref[...] = out                                   # (TB, n_out) lane-dense


def param_enc_forward(x, y, aug, params, *, task_block=None):
    """Batched ParamEnc forward (y-provided branch).

    x:   (T, n_spt, d_x) float32
    y:   (T, n_spt, d_y) float32
    aug: (T, 1, d_aug)   float32   (one aug vector per task)
    Returns (T, 1, n_out) float32  (per-task mean-pooled encoding).
    """
    w1, b1, w2, b2, w3, b3 = params
    T, n_spt, d_x = x.shape
    d_y = y.shape[-1]
    d_aug = aug.shape[-1]
    d_xy = d_x + d_y
    n_out = w3.shape[1]

    # Small T (typical for meta-learning): one grid step holds all tasks.
    if task_block is None:
        task_block = T
    assert T % task_block == 0, "task_block must divide T"
    num_blocks = T // task_block

    # Wrapper-side prep (cheap XLA ops): fuse x|y into one tensor, drop the
    # size-1 aug axis, and split W1 into its xy / aug row blocks.
    xy = jnp.concatenate([x, y], axis=-1)              # (T, n_spt, d_xy)
    aug2 = aug.reshape(T, d_aug)                       # (T, d_aug)
    w1xy = w1[:d_xy]                                   # (d_xy, H1)
    w1a = w1[d_xy:]                                    # (d_aug, H1)

    def resident(a):  # full-array block, constant index -> loaded once
        return pl.BlockSpec(a.shape, lambda t, nd=a.ndim: (0,) * nd)

    grid_spec = pltpu.PrefetchScalarGridSpec(
        num_scalar_prefetch=0,
        grid=(num_blocks,),
        in_specs=[
            pl.BlockSpec((task_block, n_spt, d_xy), lambda t: (t, 0, 0)),
            pl.BlockSpec((task_block, d_aug), lambda t: (t, 0)),
            resident(w1xy), resident(w1a), resident(b1),
            resident(w2), resident(b2), resident(w3), resident(b3),
        ],
        out_specs=pl.BlockSpec((task_block, n_out), lambda t: (t, 0)),
    )

    # Single step (or few steps) -> no benefit from megacore splitting here.
    semantics = ("arbitrary",) if num_blocks == 1 else ("parallel",)

    out2d = pl.pallas_call(
        param_enc_kernel,
        out_shape=jax.ShapeDtypeStruct((T, n_out), jnp.float32),
        grid_spec=grid_spec,
        compiler_params=pltpu.CompilerParams(dimension_semantics=semantics),
    )(xy, aug2, w1xy, w1a, b1, w2, b2, w3, b3)

    return out2d.reshape(T, 1, n_out)


def xavier_normal(key, fan_in, fan_out):
    # matches torch.nn.init.xavier_normal_ (gain=1); stored as (in, out)
    std = (2.0 / (fan_in + fan_out)) ** 0.5
    return std * jax.random.normal(key, (fan_in, fan_out), dtype=jnp.float32)


def init_params(key, n_xyaug, n_hid, n_out):
    k1, k2, k3 = jax.random.split(key, 3)
    w1 = xavier_normal(k1, n_xyaug, n_hid[0])
    b1 = jnp.zeros((1, n_hid[0]), jnp.float32)
    w2 = xavier_normal(k2, n_hid[0], n_hid[1])
    b2 = jnp.zeros((1, n_hid[1]), jnp.float32)
    w3 = xavier_normal(k3, n_hid[1], n_out)
    b3 = jnp.zeros((1, n_out), jnp.float32)
    return (w1, b1, w2, b2, w3, b3)


if __name__ == "__main__":
    key = jax.random.PRNGKey(0)
    kx, ky, ka, kp = jax.random.split(key, 4)

    # Small shapes consistent with the module: T tasks, n_spt support points,
    # n_xyaug = d_x + d_y + d_aug input width, two hidden widths, n_out.
    T, n_spt, d_x, d_y, d_aug = 8, 8, 4, 4, 8
    n_xyaug = d_x + d_y + d_aug
    n_hid = [32, 32]
    n_out = 16

    x = jax.random.normal(kx, (T, n_spt, d_x), dtype=jnp.float32)
    y = jax.random.normal(ky, (T, n_spt, d_y), dtype=jnp.float32)
    aug = jax.random.normal(ka, (T, 1, d_aug), dtype=jnp.float32)
    params = init_params(kp, n_xyaug, n_hid, n_out)

    fwd = jax.jit(param_enc_forward)
    out = fwd(x, y, aug, params)
    jax.block_until_ready(out)
    assert out.shape == (T, 1, n_out)

    # Pure-JAX reference following the torch module exactly (f32 everywhere):
    # aug.repeat -> concat -> MLP -> mean over support points (keepdim).
    w1, b1, w2, b2, w3, b3 = params
    aug_rep = jnp.repeat(aug, n_spt, axis=1)              # (T, n_spt, d_aug)
    xyaug = jnp.concatenate([x, y, aug_rep], axis=-1)     # (T, n_spt, n_xyaug)
    h = jnp.maximum(jnp.einsum('tsi,ih->tsh', xyaug, w1) + b1, 0.0)
    h = jnp.maximum(jnp.einsum('tsh,hk->tsk', h, w2) + b2, 0.0)
    ref = jnp.einsum('tsk,ko->tso', h, w3) + b3
    ref = ref.mean(axis=1, keepdims=True)                 # (T, 1, n_out)

    # Kernel is all-f32 (split-W1 and hoisted mean are algebraically exact);
    # only fp-summation-order differences remain.
    err = float(jnp.max(jnp.abs(out - ref)))
    assert jnp.allclose(out, ref, atol=1e-4, rtol=1e-4), err

    print("KERNEL_OK")
</pallas_src>

<mosaic_0001>
module attributes {stable_mosaic.version = 11 : i64} {
  func.func @param_enc_kernel(%arg0: i32, %arg1: memref<8x8x8xf32, #tpu.memory_space<vmem>>, %arg2: memref<8x8xf32, #tpu.memory_space<vmem>>, %arg3: memref<8x32xf32, #tpu.memory_space<vmem>>, %arg4: memref<8x32xf32, #tpu.memory_space<vmem>>, %arg5: memref<1x32xf32, #tpu.memory_space<vmem>>, %arg6: memref<32x32xf32, #tpu.memory_space<vmem>>, %arg7: memref<1x32xf32, #tpu.memory_space<vmem>>, %arg8: memref<32x16xf32, #tpu.memory_space<vmem>>, %arg9: memref<1x16xf32, #tpu.memory_space<vmem>>, %arg10: memref<8x16xf32, #tpu.memory_space<vmem>>) attributes {dimension_semantics = [#tpu.dimension_semantics<arbitrary>], iteration_bounds = array<i64: 1>, scalar_prefetch = 0 : i64, scratch_operands = 0 : i64, tpu.core_type = #tpu.core_type<tc>, window_params = [{transform_indices = @transform_0, window_bounds = array<i64: 8, 8, 8>}, {transform_indices = @transform_1, window_bounds = array<i64: 8, 8>}, {pipeline_mode = #tpu.pipeline_mode<synchronous>, transform_indices = @transform_2, window_bounds = array<i64: 8, 32>}, {pipeline_mode = #tpu.pipeline_mode<synchronous>, transform_indices = @transform_3, window_bounds = array<i64: 8, 32>}, {pipeline_mode = #tpu.pipeline_mode<synchronous>, transform_indices = @transform_4, window_bounds = array<i64: 1, 32>}, {pipeline_mode = #tpu.pipeline_mode<synchronous>, transform_indices = @transform_5, window_bounds = array<i64: 32, 32>}, {pipeline_mode = #tpu.pipeline_mode<synchronous>, transform_indices = @transform_6, window_bounds = array<i64: 1, 32>}, {pipeline_mode = #tpu.pipeline_mode<synchronous>, transform_indices = @transform_7, window_bounds = array<i64: 32, 16>}, {pipeline_mode = #tpu.pipeline_mode<synchronous>, transform_indices = @transform_8, window_bounds = array<i64: 1, 16>}, {transform_indices = @transform_9, window_bounds = array<i64: 8, 16>}]} {
    %c0 = arith.constant 0 : index
    %c0_0 = arith.constant 0 : index
    %c0_1 = arith.constant 0 : index
    %0 = vector.load %arg1[%c0, %c0_0, %c0_1] : memref<8x8x8xf32, #tpu.memory_space<vmem>>, vector<8x8x8xf32>
    %c0_2 = arith.constant 0 : index
    %c0_3 = arith.constant 0 : index
    %1 = vector.load %arg2[%c0_2, %c0_3] : memref<8x8xf32, #tpu.memory_space<vmem>>, vector<8x8xf32>
    %c0_4 = arith.constant 0 : index
    %c0_5 = arith.constant 0 : index
    %2 = vector.load %arg4[%c0_4, %c0_5] : memref<8x32xf32, #tpu.memory_space<vmem>>, vector<8x32xf32>
    %cst = arith.constant dense<0.000000e+00> : vector<8x32xf32>
    %3 = tpu.matmul %1, %2, %cst {dimension_numbers = #tpu.dot_dimension_numbers<[1], [0], [0], [1], [0, 0, 1, 1], [], []>} : vector<8x8xf32>, vector<8x32xf32>, vector<8x32xf32> -> vector<8x32xf32>
    %c0_6 = arith.constant 0 : index
    %c0_7 = arith.constant 0 : index
    %4 = vector.load %arg5[%c0_6, %c0_7] : memref<1x32xf32, #tpu.memory_space<vmem>>, vector<1x32xf32>
    %5 = vector.broadcast %4 : vector<1x32xf32> to vector<8x32xf32>
    %6 = arith.addf %3, %5 : vector<8x32xf32>
    %c0_8 = arith.constant 0 : index
    %c0_9 = arith.constant 0 : index
    %7 = vector.load %arg3[%c0_8, %c0_9] : memref<8x32xf32, #tpu.memory_space<vmem>>, vector<8x32xf32>
    "tpu.trace_start"() <{level = 10 : i32, message = "tsi,ih->tsh"}> : () -> ()
    %cst_10 = arith.constant dense<0.000000e+00> : vector<8x8x32xf32>
    %8 = tpu.matmul %0, %7, %cst_10 {dimension_numbers = #tpu.dot_dimension_numbers<[2], [0], [0, 1], [1], [0, 0, 0, 1, 1, 1], [], []>} : vector<8x8x8xf32>, vector<8x32xf32>, vector<8x8x32xf32> -> vector<8x8x32xf32>
    "tpu.trace_stop"() : () -> ()
    %9 = vector.shape_cast %6 : vector<8x32xf32> to vector<8x1x32xf32>
    %10 = vector.broadcast %9 : vector<8x1x32xf32> to vector<8x8x32xf32>
    %11 = arith.addf %8, %10 : vector<8x8x32xf32>
    %cst_11 = arith.constant 0.000000e+00 : f32
    %12 = vector.broadcast %cst_11 : f32 to vector<8x8x32xf32>
    %13 = arith.maximumf %11, %12 : vector<8x8x32xf32>
    %c0_12 = arith.constant 0 : index
    %c0_13 = arith.constant 0 : index
    %14 = vector.load %arg6[%c0_12, %c0_13] : memref<32x32xf32, #tpu.memory_space<vmem>>, vector<32x32xf32>
    "tpu.trace_start"() <{level = 10 : i32, message = "tsh,hk->tsk"}> : () -> ()
    %cst_14 = arith.constant dense<0.000000e+00> : vector<8x8x32xf32>
    %15 = tpu.matmul %13, %14, %cst_14 {dimension_numbers = #tpu.dot_dimension_numbers<[2], [0], [0, 1], [1], [0, 0, 0, 1, 1, 1], [], []>} : vector<8x8x32xf32>, vector<32x32xf32>, vector<8x8x32xf32> -> vector<8x8x32xf32>
    "tpu.trace_stop"() : () -> ()
    %c0_15 = arith.constant 0 : index
    %c0_16 = arith.constant 0 : index
    %16 = vector.load %arg7[%c0_15, %c0_16] : memref<1x32xf32, #tpu.memory_space<vmem>>, vector<1x32xf32>
    %17 = vector.shape_cast %16 : vector<1x32xf32> to vector<1x1x32xf32>
    %18 = vector.broadcast %17 : vector<1x1x32xf32> to vector<8x8x32xf32>
    %19 = arith.addf %15, %18 : vector<8x8x32xf32>
    %cst_17 = arith.constant 0.000000e+00 : f32
    %20 = vector.broadcast %cst_17 : f32 to vector<8x8x32xf32>
    %21 = arith.maximumf %19, %20 : vector<8x8x32xf32>
    %cst_18 = arith.constant dense<0.000000e+00> : vector<8x32xf32>
    %22 = vector.multi_reduction <add>, %21, %cst_18 [1] : vector<8x8x32xf32> to vector<8x32xf32>
    %cst_19 = arith.constant 8.000000e+00 : f32
    %23 = vector.broadcast %cst_19 : f32 to vector<8x32xf32>
    %24 = arith.divf %22, %23 : vector<8x32xf32>
    %c0_20 = arith.constant 0 : index
    %c0_21 = arith.constant 0 : index
    %25 = vector.load %arg8[%c0_20, %c0_21] : memref<32x16xf32, #tpu.memory_space<vmem>>, vector<32x16xf32>
    %cst_22 = arith.constant dense<0.000000e+00> : vector<8x16xf32>
    %26 = tpu.matmul %24, %25, %cst_22 {dimension_numbers = #tpu.dot_dimension_numbers<[1], [0], [0], [1], [0, 0, 1, 1], [], []>} : vector<8x32xf32>, vector<32x16xf32>, vector<8x16xf32> -> vector<8x16xf32>
    %c0_23 = arith.constant 0 : index
    %c0_24 = arith.constant 0 : index
    %27 = vector.load %arg9[%c0_23, %c0_24] : memref<1x16xf32, #tpu.memory_space<vmem>>, vector<1x16xf32>
    %28 = vector.broadcast %27 : vector<1x16xf32> to vector<8x16xf32>
    %29 = arith.addf %26, %28 : vector<8x16xf32>
    %c0_25 = arith.constant 0 : index
    %c0_26 = arith.constant 0 : index
    %30 = vector.load %arg10[%c0_25, %c0_26] : memref<8x16xf32, #tpu.memory_space<vmem>>, vector<8x16xf32>
    tpu.vector_store %arg10[%c0_25, %c0_26], %29 {strides = array<i32>} : memref<8x16xf32, #tpu.memory_space<vmem>>, vector<8x16xf32>,
    return
  }
  func.func @transform_0(%arg0: i32) -> (i32, i32, i32) {
    %c0_i32 = arith.constant 0 : i32
    %c0_i32_0 = arith.constant 0 : i32
    %c0_i32_1 = arith.constant 0 : i32
    return %arg0, %c0_i32, %c0_i32_0 : i32, i32, i32
  }
  func.func @transform_1(%arg0: i32) -> (i32, i32) {
    %c0_i32 = arith.constant 0 : i32
    %c0_i32_0 = arith.constant 0 : i32
    return %arg0, %c0_i32 : i32, i32
  }
  func.func @transform_2(%arg0: i32) -> (i32, i32) {
    %c0_i32 = arith.constant 0 : i32
    %c0_i32_0 = arith.constant 0 : i32
    %c0_i32_1 = arith.constant 0 : i32
    return %c0_i32, %c0_i32_0 : i32, i32
  }
  func.func @transform_3(%arg0: i32) -> (i32, i32) {
    %c0_i32 = arith.constant 0 : i32
    %c0_i32_0 = arith.constant 0 : i32
    %c0_i32_1 = arith.constant 0 : i32
    return %c0_i32, %c0_i32_0 : i32, i32
  }
  func.func @transform_4(%arg0: i32) -> (i32, i32) {
    %c0_i32 = arith.constant 0 : i32
    %c0_i32_0 = arith.constant 0 : i32
    %c0_i32_1 = arith.constant 0 : i32
    return %c0_i32, %c0_i32_0 : i32, i32
  }
  func.func @transform_5(%arg0: i32) -> (i32, i32) {
    %c0_i32 = arith.constant 0 : i32
    %c0_i32_0 = arith.constant 0 : i32
    %c0_i32_1 = arith.constant 0 : i32
    return %c0_i32, %c0_i32_0 : i32, i32
  }
  func.func @transform_6(%arg0: i32) -> (i32, i32) {
    %c0_i32 = arith.constant 0 : i32
    %c0_i32_0 = arith.constant 0 : i32
    %c0_i32_1 = arith.constant 0 : i32
    return %c0_i32, %c0_i32_0 : i32, i32
  }
  func.func @transform_7(%arg0: i32) -> (i32, i32) {
    %c0_i32 = arith.constant 0 : i32
    %c0_i32_0 = arith.constant 0 : i32
    %c0_i32_1 = arith.constant 0 : i32
    return %c0_i32, %c0_i32_0 : i32, i32
  }
  func.func @transform_8(%arg0: i32) -> (i32, i32) {
    %c0_i32 = arith.constant 0 : i32
    %c0_i32_0 = arith.constant 0 : i32
    %c0_i32_1 = arith.constant 0 : i32
    return %c0_i32, %c0_i32_0 : i32, i32
  }
  func.func @transform_9(%arg0: i32) -> (i32, i32) {
    %c0_i32 = arith.constant 0 : i32
    %c0_i32_0 = arith.constant 0 : i32
    return %arg0, %c0_i32 : i32, i32
  }
}

</mosaic_0001>

<llo_original>
// kernel: param_enc_forward.1
$region0: #{param_enc_forward.1}
  #allocation0 [shape = 'u32[]', space=smem, size = 0x4, offset = 0x4, fixed_abs, tag = 'smem constant byte address 0x4 - core index']
  #allocation1 [shape = 'u32[72,128]{1,0:T(1,128)}', space=vmem, size = 0x9000, scoped, tag = 'internal scratch']
  %s0 = inlined_call_operand.vmem [shape: f32[8,8,8], index: 0, kind: input, shape index: {}]
  %s1 = inlined_call_operand.vmem [shape: f32[8,8], index: 1, kind: input, shape index: {}]
  %s2 = inlined_call_operand.vmem [shape: f32[8,32], index: 2, kind: input, shape index: {}]
  %s3 = inlined_call_operand.vmem [shape: f32[8,32], index: 3, kind: input, shape index: {}]
  %s4 = inlined_call_operand.vmem [shape: f32[1,32], index: 4, kind: input, shape index: {}]
  %s5 = inlined_call_operand.vmem [shape: f32[32,32], index: 5, kind: input, shape index: {}]
  %s6 = inlined_call_operand.vmem [shape: f32[1,32], index: 6, kind: input, shape index: {}]
  %s7 = inlined_call_operand.vmem [shape: f32[32,16], index: 7, kind: input, shape index: {}]
  %s8 = inlined_call_operand.vmem [shape: f32[1,16], index: 8, kind: input, shape index: {}]
  %s9 = inlined_call_operand.hbm [shape: f32[8,16], index: 9, kind: output, shape index: {}]
  %s10 = sld [smem:[#allocation0]]
  $region46: #{param_enc_forward.1} parent=0
    _
  %s12 = ssub.s32 1, %s10
  %s13 = scalar_select 0, %s12, %s10
  $region1: #{param_enc_forward.1} parent=0
    #allocation2 [shape = 'u8[4096]{0}', space=vmem, size = 0x1000, scoped, tag = 'output window, operand 0, single buffered']
    #allocation3 [shape = 's32[1]{0}', space=sflag, size = 0x4, scoped, tag = 'scoped memory for param_enc_forward.1']
    %14 = vsyncpa [#allocation3], 0
    // Predicated region
    $region2: #{param_enc_forward.1} parent=1 // pred_check
      _
    $region3: #{param_enc_forward.1} parent=1 // pred_check_branch
      %16 = sbr.rel (0) target = $region5
    $region4: #{param_enc_forward.1} parent=1 // pred_region
      _
    $region5: #{param_enc_forward.1} parent=1 // pred_fallthru
      _
    // Predicated region
    $region6: #{param_enc_forward.1} parent=1 // pred_check
      _
    $region7: #{param_enc_forward.1} parent=1 // pred_check_branch
      %18 = sbr.rel (0) target = $region9
    $region8: #{param_enc_forward.1} parent=1 // pred_region
      _
    $region9: #{param_enc_forward.1} parent=1 // pred_fallthru
      _
    // Predicated region
    $region10: #{param_enc_forward.1} parent=1 // pred_check
      _
    $region11: #{param_enc_forward.1} parent=1 // pred_check_branch
      %20 = sbr.rel (0) target = $region13
    $region12: #{param_enc_forward.1} parent=1 // pred_region
      _
    $region13: #{param_enc_forward.1} parent=1 // pred_fallthru
      _
    // Predicated region
    $region14: #{param_enc_forward.1} parent=1 // pred_check
      _
    $region15: #{param_enc_forward.1} parent=1 // pred_check_branch
      %22 = sbr.rel (0) target = $region17
    $region16: #{param_enc_forward.1} parent=1 // pred_region
      _
    $region17: #{param_enc_forward.1} parent=1 // pred_fallthru
      _
    // Predicated region
    $region18: #{param_enc_forward.1} parent=1 // pred_check
      _
    $region19: #{param_enc_forward.1} parent=1 // pred_check_branch
      %24 = sbr.rel (0) target = $region21
    $region20: #{param_enc_forward.1} parent=1 // pred_region
      _
    $region21: #{param_enc_forward.1} parent=1 // pred_fallthru
      _
    // Predicated region
    $region22: #{param_enc_forward.1} parent=1 // pred_check
      _
    $region23: #{param_enc_forward.1} parent=1 // pred_check_branch
      %26 = sbr.rel (0) target = $region25
    $region24: #{param_enc_forward.1} parent=1 // pred_region
      _
    $region25: #{param_enc_forward.1} parent=1 // pred_fallthru
      _
    // Predicated region
    $region26: #{param_enc_forward.1} parent=1 // pred_check
      _
    $region27: #{param_enc_forward.1} parent=1 // pred_check_branch
      %28 = sbr.rel (0) target = $region29
    $region28: #{param_enc_forward.1} parent=1 // pred_region
      _
    $region29: #{param_enc_forward.1} parent=1 // pred_fallthru
      _
    // Predicated region
    $region30: #{param_enc_forward.1} parent=1 // pred_check
      _
    $region31: #{param_enc_forward.1} parent=1 // pred_check_branch
      %30 = sbr.rel (0) target = $region33
    $region32: #{param_enc_forward.1} parent=1 // pred_region
      _
    $region33: #{param_enc_forward.1} parent=1 // pred_fallthru
      _
    // Predicated region
    $region34: #{param_enc_forward.1} parent=1 // pred_check
      _
    $region35: #{param_enc_forward.1} parent=1 // pred_check_branch
      %32 = sbr.rel (0) target = $region37
    $region36: #{param_enc_forward.1} parent=1 // pred_region
      _
    $region37: #{param_enc_forward.1} parent=1 // pred_fallthru
      _
    %v33 = vld [vmem:[%s0] sm:$0xff]
    %v34 = vld [vmem:[%s0 + $0x8] sm:$0xff]
    %v35 = vld [vmem:[%s0 + $0x10] sm:$0xff]
    %v36 = vld [vmem:[%s0 + $0x18] sm:$0xff]
    %v37 = vld [vmem:[%s0 + $0x20] sm:$0xff]
    %v38 = vld [vmem:[%s0 + $0x28] sm:$0xff]
    %v39 = vld [vmem:[%s0 + $0x30] sm:$0xff]
    %v40 = vld [vmem:[%s0 + $0x38] sm:$0xff]
    %v41 = vld [vmem:[%s1] sm:$0xff]
    %v42 = vld [vmem:[%s3] sm:$0xff]
    %v43 = vld [vmem:[%s4] sm:$0x1]
    %v45 = vperm.slane %v43, 0
    %vm47 = vcmask 64512
    %v49 = vsel %vm47, %v41, 0
    %51 = vmatpush.msra.mxu0 0.0
    %52 = vmatpush.msra.mxu0 0.0
    %53 = vmatpush.msra.mxu0 0.0
    %54 = vmatpush.msra.mxu0 0.0
    %55 = vmatpush.msra.mxu0 0.0
    %56 = vmatpush.msra.mxu0 0.0
    %57 = vmatpush.msra.mxu0 0.0
    %58 = vmatpush.msra.mxu0 0.0
    %59 = vmatpush.msra.mxu0 0.0
    %60 = vmatpush.msra.mxu0 0.0
    %61 = vmatpush.msra.mxu0 0.0
    %62 = vmatpush.msra.mxu0 0.0
    %63 = vmatpush.msra.mxu0 0.0
    %64 = vmatpush.msra.mxu0 0.0
    %65 = vmatpush.msra.mxu0 0.0
    %66 = vmatpush.msra.mxu0 %v42
    %67 = vmatmul.f32.gmra.mxu0 %v49
    %v68 = vpop.f32.mrf.mxu0
    %v69 = vadd.f32 %v45, %v68
    %70 = vdwg.mxu0
    %v71 = vld [vmem:[%s2] sm:$0xff]
    %v73 = vrot.slane %v69, 1
    %v74 = vrot.slane %v69, 2
    %v75 = vrot.slane %v69, 3
    %v76 = vrot.slane %v69, 4
    %v77 = vrot.slane %v69, 5
    %v78 = vrot.slane %v69, 6
    %v79 = vrot.slane %v69, 7
    %v80 = vperm.slane %v69, 0
    %v81 = vperm.slane %v73, 0
    %v82 = vperm.slane %v74, 0
    %v83 = vperm.slane %v75, 0
    %v84 = vperm.slane %v76, 0
    %v85 = vperm.slane %v77, 0
    %v86 = vperm.slane %v78, 0
    %v87 = vperm.slane %v79, 0
    %v97 = vsel %vm47, %v33, 0
    %v100 = vsel %vm47, %v34, 0
    %v103 = vsel %vm47, %v35, 0
    %v106 = vsel %vm47, %v36, 0
    %v109 = vsel %vm47, %v37, 0
    %v112 = vsel %vm47, %v38, 0
    %v115 = vsel %vm47, %v39, 0
    %v118 = vsel %vm47, %v40, 0
    %120 = vmatpush.msra.mxu0 0.0
    %121 = vmatpush.msra.mxu0 0.0
    %122 = vmatpush.msra.mxu0 0.0
    %123 = vmatpush.msra.mxu0 0.0
    %124 = vmatpush.msra.mxu0 0.0
    %125 = vmatpush.msra.mxu0 0.0
    %126 = vmatpush.msra.mxu0 0.0
    %127 = vmatpush.msra.mxu0 0.0
    %128 = vmatpush.msra.mxu0 0.0
    %129 = vmatpush.msra.mxu0 0.0
    %130 = vmatpush.msra.mxu0 0.0
    %131 = vmatpush.msra.mxu0 0.0
    %132 = vmatpush.msra.mxu0 0.0
    %133 = vmatpush.msra.mxu0 0.0
    %134 = vmatpush.msra.mxu0 0.0
    %135 = vmatpush.msra.mxu0 %v71
    %136 = vmatmul.f32.gmra.mxu0 %v97
    %v137 = vpop.f32.mrf.mxu0
    %v138 = vadd.f32 %v80, %v137
    %139 = vmatmul.f32.gmra.mxu0 %v100
    %v140 = vpop.f32.mrf.mxu0
    %v141 = vadd.f32 %v81, %v140
    %142 = vmatmul.f32.gmra.mxu0 %v103
    %v143 = vpop.f32.mrf.mxu0
    %v144 = vadd.f32 %v82, %v143
    %145 = vmatmul.f32.gmra.mxu0 %v106
    %v146 = vpop.f32.mrf.mxu0
    %v147 = vadd.f32 %v83, %v146
    %148 = vmatmul.f32.gmra.mxu0 %v109
    %v149 = vpop.f32.mrf.mxu0
    %v150 = vadd.f32 %v84, %v149
    %151 = vmatmul.f32.gmra.mxu0 %v112
    %v152 = vpop.f32.mrf.mxu0
    %v153 = vadd.f32 %v85, %v152
    %154 = vmatmul.f32.gmra.mxu0 %v115
    %v155 = vpop.f32.mrf.mxu0
    %v156 = vadd.f32 %v86, %v155
    %157 = vmatmul.f32.gmra.mxu0 %v118
    %v158 = vpop.f32.mrf.mxu0
    %v159 = vadd.f32 %v87, %v158
    %160 = vdwg.mxu0
    %v161 = vmax.f32 %v138, 0.0
    %v162 = vmax.f32 %v141, 0.0
    %v163 = vmax.f32 %v144, 0.0
    %v164 = vmax.f32 %v147, 0.0
    %v165 = vmax.f32 %v150, 0.0
    %v166 = vmax.f32 %v153, 0.0
    %v167 = vmax.f32 %v156, 0.0
    %v168 = vmax.f32 %v159, 0.0
    %v169 = vld [vmem:[%s5] sm:$0xff]
    %v170 = vld [vmem:[%s5 + $0x8] sm:$0xff]
    %v171 = vld [vmem:[%s5 + $0x10] sm:$0xff]
    %v172 = vld [vmem:[%s5 + $0x18] sm:$0xff]
    %v173 = vld [vmem:[%s6] sm:$0x1]
    %v175 = vperm.slane %v173, 0
    %vm177 = vcmask 261120
    %v179 = vsel %vm177, %v161, 0
    %v182 = vsel %vm177, %v162, 0
    %v185 = vsel %vm177, %v163, 0
    %v188 = vsel %vm177, %v164, 0
    %v191 = vsel %vm177, %v165, 0
    %v194 = vsel %vm177, %v166, 0
    %v197 = vsel %vm177, %v167, 0
    %v200 = vsel %vm177, %v168, 0
    %202 = vmatpush.msra.mxu0 0.0
    %203 = vmatpush.msra.mxu0 0.0
    %204 = vmatpush.msra.mxu0 0.0
    %205 = vmatpush.msra.mxu0 0.0
    %206 = vmatpush.msra.mxu0 0.0
    %207 = vmatpush.msra.mxu0 0.0
    %208 = vmatpush.msra.mxu0 0.0
    %209 = vmatpush.msra.mxu0 0.0
    %210 = vmatpush.msra.mxu0 0.0
    %211 = vmatpush.msra.mxu0 0.0
    %212 = vmatpush.msra.mxu0 0.0
    %213 = vmatpush.msra.mxu0 0.0
    %214 = vmatpush.msra.mxu0 %v172
    %215 = vmatpush.msra.mxu0 %v171
    %216 = vmatpush.msra.mxu0 %v170
    %217 = vmatpush.msra.mxu0 %v169
    %218 = vmatmul.f32.gmra.mxu0 %v179
    %v219 = vpop.f32.mrf.mxu0
    %v220 = vadd.f32 %v175, %v219
    %221 = vmatmul.f32.gmra.mxu0 %v182
    %v222 = vpop.f32.mrf.mxu0
    %v223 = vadd.f32 %v175, %v222
    %224 = vmatmul.f32.gmra.mxu0 %v185
    %v225 = vpop.f32.mrf.mxu0
    %v226 = vadd.f32 %v175, %v225
    %227 = vmatmul.f32.gmra.mxu0 %v188
    %v228 = vpop.f32.mrf.mxu0
    %v229 = vadd.f32 %v175, %v228
    %230 = vmatmul.f32.gmra.mxu0 %v191
    %v231 = vpop.f32.mrf.mxu0
    %v232 = vadd.f32 %v175, %v231
    %233 = vmatmul.f32.gmra.mxu0 %v194
    %v234 = vpop.f32.mrf.mxu0
    %v235 = vadd.f32 %v175, %v234
    %236 = vmatmul.f32.gmra.mxu0 %v197
    %v237 = vpop.f32.mrf.mxu0
    %v238 = vadd.f32 %v175, %v237
    %239 = vmatmul.f32.gmra.mxu0 %v200
    %v240 = vpop.f32.mrf.mxu0
    %v241 = vadd.f32 %v175, %v240
    %242 = vdwg.mxu0
    %v243 = vmax.f32 %v220, 0.0
    %v244 = vmax.f32 %v223, 0.0
    %v245 = vmax.f32 %v226, 0.0
    %v246 = vmax.f32 %v229, 0.0
    %v247 = vmax.f32 %v232, 0.0
    %v248 = vmax.f32 %v235, 0.0
    %v249 = vmax.f32 %v238, 0.0
    %v250 = vmax.f32 %v241, 0.0
    %v251 = vsel %vm177, %v243, 0.0
    %v252 = vrot.slane %v251, 4
    %v253 = vadd.f32 %v251, %v252
    %v254 = vrot.slane %v253, 2
    %v255 = vadd.f32 %v253, %v254
    %v256 = vrot.slane %v255, 1
    %v257 = vadd.f32 %v255, %v256
    %v258 = vsel %vm177, %v244, 0.0
    %v259 = vrot.slane %v258, 4
    %v260 = vadd.f32 %v258, %v259
    %v261 = vrot.slane %v260, 2
    %v262 = vadd.f32 %v260, %v261
    %v263 = vrot.slane %v262, 1
    %v264 = vadd.f32 %v262, %v263
    %v265 = vsel %vm177, %v245, 0.0
    %v266 = vrot.slane %v265, 4
    %v267 = vadd.f32 %v265, %v266
    %v268 = vrot.slane %v267, 2
    %v269 = vadd.f32 %v267, %v268
    %v270 = vrot.slane %v269, 1
    %v271 = vadd.f32 %v269, %v270
    %v272 = vsel %vm177, %v246, 0.0
    %v273 = vrot.slane %v272, 4
    %v274 = vadd.f32 %v272, %v273
    %v275 = vrot.slane %v274, 2
    %v276 = vadd.f32 %v274, %v275
    %v277 = vrot.slane %v276, 1
    %v278 = vadd.f32 %v276, %v277
    %v279 = vsel %vm177, %v247, 0.0
    %v280 = vrot.slane %v279, 4
    %v281 = vadd.f32 %v279, %v280
    %v282 = vrot.slane %v281, 2
    %v283 = vadd.f32 %v281, %v282
    %v284 = vrot.slane %v283, 1
    %v285 = vadd.f32 %v283, %v284
    %v286 = vsel %vm177, %v248, 0.0
    %v287 = vrot.slane %v286, 4
    %v288 = vadd.f32 %v286, %v287
    %v289 = vrot.slane %v288, 2
    %v290 = vadd.f32 %v288, %v289
    %v291 = vrot.slane %v290, 1
    %v292 = vadd.f32 %v290, %v291
    %v293 = vsel %vm177, %v249, 0.0
    %v294 = vrot.slane %v293, 4
    %v295 = vadd.f32 %v293, %v294
    %v296 = vrot.slane %v295, 2
    %v297 = vadd.f32 %v295, %v296
    %v298 = vrot.slane %v297, 1
    %v299 = vadd.f32 %v297, %v298
    %v300 = vsel %vm177, %v250, 0.0
    %v301 = vrot.slane %v300, 4
    %v302 = vadd.f32 %v300, %v301
    %v303 = vrot.slane %v302, 2
    %v304 = vadd.f32 %v302, %v303
    %v305 = vrot.slane %v304, 1
    %v306 = vadd.f32 %v304, %v305
    %v307 = vrcp.pop 8.0
    %v308 = vmul.f32 8.0, %v307
    %v309 = vsub.f32 1.0, %v308
    %v310 = vmul.f32 %v307, %v309
    %v311 = vadd.f32 %v307, %v310
    %vm312 = vweird.f32 %v307
    %v313 = vsel %vm312, %v307, %v311
    %v314 = vmul.f32 %v257, %v313
    %v315 = vmul.f32 %v264, %v313
    %v316 = vmul.f32 %v271, %v313
    %v317 = vmul.f32 %v278, %v313
    %v318 = vmul.f32 %v285, %v313
    %v319 = vmul.f32 %v292, %v313
    %v320 = vmul.f32 %v299, %v313
    %v321 = vmul.f32 %v306, %v313
    %v322 = vld [vmem:[%s7] sm:$0xff]
    %v323 = vld [vmem:[%s7 + $0x8] sm:$0xff]
    %v324 = vld [vmem:[%s7 + $0x10] sm:$0xff]
    %v325 = vld [vmem:[%s7 + $0x18] sm:$0xff]
    %v326 = vld [vmem:[%s8] sm:$0x1]
    %v328 = vperm.slane %v326, 0
    %vm338 = vcmask 1041409
    %v339 = vsel %vm338, %v315, %v314
    %vm340 = vcmask 1042434
    %v341 = vsel %vm340, %v316, %v339
    %vm342 = vcmask 1043459
    %v343 = vsel %vm342, %v317, %v341
    %vm344 = vcmask 1044484
    %v345 = vsel %vm344, %v318, %v343
    %vm346 = vcmask 1045509
    %v347 = vsel %vm346, %v319, %v345
    %vm348 = vcmask 1046534
    %v349 = vsel %vm348, %v320, %v347
    %vm350 = vcmask 1047559
    %v351 = vsel %vm350, %v321, %v349
    %v352 = vsel %vm177, %v351, 0
    %354 = vmatpush.msra.mxu0 0.0
    %355 = vmatpush.msra.mxu0 0.0
    %356 = vmatpush.msra.mxu0 0.0
    %357 = vmatpush.msra.mxu0 0.0
    %358 = vmatpush.msra.mxu0 0.0
    %359 = vmatpush.msra.mxu0 0.0
    %360 = vmatpush.msra.mxu0 0.0
    %361 = vmatpush.msra.mxu0 0.0
    %362 = vmatpush.msra.mxu0 0.0
    %363 = vmatpush.msra.mxu0 0.0
    %364 = vmatpush.msra.mxu0 0.0
    %365 = vmatpush.msra.mxu0 0.0
    %366 = vmatpush.msra.mxu0 %v325
    %367 = vmatpush.msra.mxu0 %v324
    %368 = vmatpush.msra.mxu0 %v323
    %369 = vmatpush.msra.mxu0 %v322
    %370 = vmatmul.f32.gmra.mxu0 %v352
    %v371 = vpop.f32.mrf.mxu0
    %v372 = vadd.f32 %v328, %v371
    %373 = vdwg.mxu0
    %vm374 = vcmask 130048
    %375 = vst.msk [vmem:[#allocation2] sm:$0xff] %vm374, %v372
    // Predicated region
    $region38: #{param_enc_forward.1} parent=1 // pred_check
      _
    $region39: #{param_enc_forward.1} parent=1 // pred_check_branch
      %377 = sbr.rel (0) target = $region41
    $region40: #{param_enc_forward.1} parent=1 // pred_region
      %379 = vsyncadd [#allocation3], 0
      %s381 = sshll.u32 [#allocation2], 4
      %s382 = int_to_ptr.vmem [resolvable:$true] %s381
      %s383 = sshll.u32 %s9, 4
      %s384 = int_to_ptr.hbm [resolvable:$true] %s383
      %386 = dma.vmem_to_hbm [thread:$0]  %s382, 128, %s384, [#allocation3]
    $region41: #{param_enc_forward.1} parent=1 // pred_fallthru
      _
    // Predicated region
    $region42: #{param_enc_forward.1} parent=1 // pred_check
      _
    $region43: #{param_enc_forward.1} parent=1 // pred_check_branch
      %388 = sbr.rel (0) target = $region45
    $region44: #{param_enc_forward.1} parent=1 // pred_region
      %390 = dma.done [#allocation3], 128
    $region45: #{param_enc_forward.1} parent=1 // pred_fallthru
      _
    %391 = vsyncpa [#allocation3], 1

</llo_original>
